<compile_context>
chip_gen: v7x
topology: tpu7x:2x2x1
jax: 0.10.0
libtpu: 0.0.40
codegen_flags: <defaults>
</compile_context>

<pallas_src>
import functools

import jax
import jax.numpy as jnp
from jax.experimental import pallas as pl
from jax.experimental.pallas import tpu as pltpu

input_size = 5
output_size = 2

_SMALL_BATCH_MAX = 512                 # grid-less path for B <= this
_TM_MAX = 8192                         # max batch tile for the tiled path
_VMEM_LIMIT_BYTES = 32 * 1024 * 1024   # padded, double-buffered tm=8192 blocks ~17 MiB


def _linear_kernel(x_ref, w_ref, b_ref, o_ref):
    # y = x @ W + b with f32 accumulation on the MXU.
    y = jnp.dot(x_ref[...], w_ref[...], preferred_element_type=jnp.float32)
    o_ref[...] = (y + b_ref[...]).astype(o_ref.dtype)


@jax.jit
def _linear_small(x, w_t, b2):
    """Grid-less pallas_call: whole arrays in VMEM, single invocation.

    NOTE(perf): at B=8 this op is pure launch/DMA overhead; in a production
    model you would emit plain `x @ w_t + b2` and let XLA fuse it. The Pallas
    path is kept because emitting the kernel is the point of this exercise.
    """
    B, _ = x.shape
    N = w_t.shape[1]
    return pl.pallas_call(
        _linear_kernel,
        out_shape=jax.ShapeDtypeStruct((B, N), x.dtype),
        in_specs=[
            pl.BlockSpec(memory_space=pltpu.MemorySpace.VMEM),
            pl.BlockSpec(memory_space=pltpu.MemorySpace.VMEM),
            pl.BlockSpec(memory_space=pltpu.MemorySpace.VMEM),
        ],
        out_specs=pl.BlockSpec(memory_space=pltpu.MemorySpace.VMEM),
    )(x, w_t, b2)


@functools.partial(jax.jit, static_argnames=("tm",))
def _linear_tiled(x, w_t, b2, *, tm):
    """Batch-tiled path: grid over the batch axis only; W/b stay VMEM-resident."""
    B, K = x.shape
    N = w_t.shape[1]
    grid = (pl.cdiv(B, tm),)
    return pl.pallas_call(
        _linear_kernel,
        out_shape=jax.ShapeDtypeStruct((B, N), x.dtype),
        grid_spec=pl.GridSpec(
            grid=grid,
            in_specs=[
                pl.BlockSpec((tm, K), lambda i: (i, 0)),   # x: tiled over batch
                pl.BlockSpec((K, N), lambda i: (0, 0)),    # weight: grid-invariant
                pl.BlockSpec((1, N), lambda i: (0, 0)),    # bias: grid-invariant
            ],
            out_specs=pl.BlockSpec((tm, N), lambda i: (i, 0)),  # N never tiled
        ),
        compiler_params=pltpu.CompilerParams(
            dimension_semantics=("parallel",),   # v7x: two TCs split the batch grid
            vmem_limit_bytes=_VMEM_LIMIT_BYTES,  # v5e's 16 MiB default is too low at tm=8192
        ),
    )(x, w_t, b2)


def _round_up(x, m):
    return ((x + m - 1) // m) * m


def _pick_batch_tile(B, tm_max=_TM_MAX):
    """Large tiles (the kernel is per-grid-step-overhead-bound otherwise), but
    capped so the batch grid keeps >=4 steps for v7x megacore sharding."""
    tm = max(_SMALL_BATCH_MAX, _round_up(pl.cdiv(B, 4), 8))
    return min(tm_max, tm)


def linear_pallas(x, w_t, b2):
    """y = x @ w_t + b2, with w_t (in_features, out_features) and b2 (1, N)."""
    B = x.shape[0]
    if B <= _SMALL_BATCH_MAX:
        return _linear_small(x, w_t, b2)
    # TODO(synk): if the surrounding model can supply/consume a (features, batch)
    # layout, compute the transposed lane-dense problem out^T(2,tm) = W^T @ x^T
    # instead; with K=5/N=2 the row-major layout is vld/vst-slot bound at
    # 5/128 and 2/128 lane occupancy. A standalone transpose would cancel the win.
    return _linear_tiled(x, w_t, b2, tm=_pick_batch_tile(B))


class PallasModel:
    """JAX/Pallas equivalent of the PyTorch Model(input_size, output_size)."""

    def __init__(self, input_size, output_size, key):
        kw, kb = jax.random.split(key)
        # Deterministic init mimicking nn.Linear's U(-1/sqrt(fan_in), 1/sqrt(fan_in)).
        bound = 1.0 / (input_size ** 0.5)
        # PyTorch weight is (out, in); store transposed (in, out) for the kernel.
        self.w_t = jax.random.uniform(
            kw, (input_size, output_size), jnp.float32, -bound, bound)
        b = jax.random.uniform(kb, (output_size,), jnp.float32, -bound, bound)
        # Bias reshape/cast hoisted out of the per-call path (perf review).
        self.b2 = b.reshape(1, output_size).astype(jnp.float32)

    def __call__(self, x):
        out = linear_pallas(x, self.w_t, self.b2)
        # Static-shape print outside any jit trace, mirroring the PyTorch module.
        print('\tIn Model: input size', tuple(x.shape),
              'output size', tuple(out.shape))
        return out


if __name__ == "__main__":
    batch = 8

    key = jax.random.PRNGKey(0)
    k_param, k_x = jax.random.split(key)

    model = PallasModel(input_size, output_size, k_param)
    x = jax.random.normal(k_x, (batch, input_size), jnp.float32)

    # Small-batch (grid-less) Pallas path.
    out = jax.block_until_ready(model(x))
    ref = x @ model.w_t + model.b2
    assert jnp.allclose(out, ref, atol=1e-5, rtol=1e-5), "mismatch vs reference"

    # Also exercise the batch-tiled path (grid over batch, resident weights,
    # >=4 grid steps so the v7x megacore split is active).
    x_big = jax.random.normal(k_x, (4096, input_size), jnp.float32)
    out_big = jax.block_until_ready(model(x_big))
    ref_big = x_big @ model.w_t + model.b2
    assert jnp.allclose(out_big, ref_big, atol=1e-5, rtol=1e-5), \
        "mismatch vs reference (tiled path)"

    print("KERNEL_OK")
</pallas_src>

<mosaic_0001>
module attributes {stable_mosaic.version = 11 : i64} {
  func.func @_linear_kernel(%arg0: memref<8x5xf32, #tpu.memory_space<vmem>>, %arg1: memref<5x2xf32, #tpu.memory_space<vmem>>, %arg2: memref<1x2xf32, #tpu.memory_space<vmem>>, %arg3: memref<8x2xf32, #tpu.memory_space<vmem>>) attributes {dimension_semantics = [], scalar_prefetch = 0 : i64, scratch_operands = 0 : i64, tpu.core_type = #tpu.core_type<tc>} {
    %c0 = arith.constant 0 : index
    %c0_0 = arith.constant 0 : index
    %0 = vector.load %arg0[%c0, %c0_0] : memref<8x5xf32, #tpu.memory_space<vmem>>, vector<8x5xf32>
    %c0_1 = arith.constant 0 : index
    %c0_2 = arith.constant 0 : index
    %1 = vector.load %arg1[%c0_1, %c0_2] : memref<5x2xf32, #tpu.memory_space<vmem>>, vector<5x2xf32>
    %cst = arith.constant dense<0.000000e+00> : vector<8x2xf32>
    %2 = tpu.matmul %0, %1, %cst {dimension_numbers = #tpu.dot_dimension_numbers<[1], [0], [0], [1], [0, 0, 1, 1], [], []>} : vector<8x5xf32>, vector<5x2xf32>, vector<8x2xf32> -> vector<8x2xf32>
    %c0_3 = arith.constant 0 : index
    %c0_4 = arith.constant 0 : index
    %3 = vector.load %arg2[%c0_3, %c0_4] : memref<1x2xf32, #tpu.memory_space<vmem>>, vector<1x2xf32>
    %4 = vector.broadcast %3 : vector<1x2xf32> to vector<8x2xf32>
    %5 = arith.addf %2, %4 : vector<8x2xf32>
    %c0_5 = arith.constant 0 : index
    %c0_6 = arith.constant 0 : index
    %6 = vector.load %arg3[%c0_5, %c0_6] : memref<8x2xf32, #tpu.memory_space<vmem>>, vector<8x2xf32>
    tpu.vector_store %arg3[%c0_5, %c0_6], %5 {strides = array<i32>} : memref<8x2xf32, #tpu.memory_space<vmem>>, vector<8x2xf32>,
    return
  }
}

</mosaic_0001>

<llo_original>
// kernel: _linear_small.1
$region0: #{_linear_small.1}
  #allocation0 [shape = 'u32[]', space=smem, size = 0x4, offset = 0x4, fixed_abs, tag = 'smem constant byte address 0x4 - core index']
  #allocation1 [shape = 'u32[144,128]{1,0:T(1,128)}', space=vmem, size = 0x12000, scoped, tag = 'internal scratch']
  %s0 = inlined_call_operand.vmem [shape: f32[8,5], index: 0, kind: input, shape index: {}]
  %s1 = inlined_call_operand.vmem [shape: f32[5,2], index: 1, kind: input, shape index: {}]
  %s2 = inlined_call_operand.vmem [shape: f32[1,2], index: 2, kind: input, shape index: {}]
  %s3 = inlined_call_operand.vmem [shape: f32[8,2], index: 3, kind: output, shape index: {}]
  %s4 = sld [smem:[#allocation0]]
  $region22: #{_linear_small.1} parent=0
    _
  %s6 = ssub.s32 1, %s4
  %s7 = scalar_select 0, %s6, %s4
  // Predicated region
  $region2: #{_linear_small.1} parent=0 // pred_check
    _
  $region3: #{_linear_small.1} parent=0 // pred_check_branch
    %9 = sbr.rel (0) target = $region5
  $region4: #{_linear_small.1} parent=0 // pred_region
    _
  $region5: #{_linear_small.1} parent=0 // pred_fallthru
    _
  // Predicated region
  $region6: #{_linear_small.1} parent=0 // pred_check
    _
  $region7: #{_linear_small.1} parent=0 // pred_check_branch
    %11 = sbr.rel (0) target = $region9
  $region8: #{_linear_small.1} parent=0 // pred_region
    _
  $region9: #{_linear_small.1} parent=0 // pred_fallthru
    _
  // Predicated region
  $region10: #{_linear_small.1} parent=0 // pred_check
    _
  $region11: #{_linear_small.1} parent=0 // pred_check_branch
    %13 = sbr.rel (0) target = $region13
  $region12: #{_linear_small.1} parent=0 // pred_region
    _
  $region13: #{_linear_small.1} parent=0 // pred_fallthru
    _
  %v14 = vld [vmem:[%s0] sm:$0xff]
  %v15 = vld [vmem:[%s1] sm:$0x1f]
  %v16 = vld [vmem:[%s2] sm:$0x1]
  %v18 = vlaneseq
  %v19 = vshrl.u32 %v18, 7
  %v20 = vsub.s32 0, %v19
  %v21 = vrot.slane %v16, %v20
  %vm23 = vcmask 39936
  %v25 = vsel %vm23, %v14, 0
  %vm27 = vcmask 1044480
  %v29 = vsel %vm27, %v15, 0
  %31 = vmatprep.subr.mxu0 0.0
  %32 = vmatpush1.msra.mxu0 %v29
  %33 = vmatprep.subr.mxu0 0.0
  %34 = vmatpush1.msra.mxu0 0.0
  %35 = vmatprep.subr.mxu0 0.0
  %36 = vmatpush1.msra.mxu0 0.0
  %37 = vmatprep.subr.mxu0 0.0
  %38 = vmatpush1.msra.mxu0 0.0
  %39 = vmatprep.subr.mxu0 0.0
  %40 = vmatpush1.msra.mxu0 0.0
  %41 = vmatprep.subr.mxu0 0.0
  %42 = vmatpush1.msra.mxu0 0.0
  %43 = vmatprep.subr.mxu0 0.0
  %44 = vmatpush1.msra.mxu0 0.0
  %45 = vmatprep.subr.mxu0 0.0
  %46 = vmatpush1.msra.mxu0 0.0
  %47 = vmatprep.subr.mxu0 0.0
  %48 = vmatpush1.msra.mxu0 0.0
  %49 = vmatprep.subr.mxu0 0.0
  %50 = vmatpush1.msra.mxu0 0.0
  %51 = vmatprep.subr.mxu0 0.0
  %52 = vmatpush1.msra.mxu0 0.0
  %53 = vmatprep.subr.mxu0 0.0
  %54 = vmatpush1.msra.mxu0 0.0
  %55 = vmatprep.subr.mxu0 0.0
  %56 = vmatpush1.msra.mxu0 0.0
  %57 = vmatprep.subr.mxu0 0.0
  %58 = vmatpush1.msra.mxu0 0.0
  %59 = vmatprep.subr.mxu0 0.0
  %60 = vmatpush1.msra.mxu0 0.0
  %61 = vmatprep.subr.mxu0 0.0
  %62 = vmatpush1.msra.mxu0 0.0
  %63 = vmatprep.subr.mxu0 0.0
  %64 = vmatpush1.msra.mxu0 0.0
  %65 = vmatprep.subr.mxu0 0.0
  %66 = vmatpush1.msra.mxu0 0.0
  %67 = vmatprep.subr.mxu0 0.0
  %68 = vmatpush1.msra.mxu0 0.0
  %69 = vmatprep.subr.mxu0 0.0
  %70 = vmatpush1.msra.mxu0 0.0
  %71 = vmatprep.subr.mxu0 0.0
  %72 = vmatpush1.msra.mxu0 0.0
  %73 = vmatprep.subr.mxu0 0.0
  %74 = vmatpush1.msra.mxu0 0.0
  %75 = vmatprep.subr.mxu0 0.0
  %76 = vmatpush1.msra.mxu0 0.0
  %77 = vmatprep.subr.mxu0 0.0
  %78 = vmatpush1.msra.mxu0 0.0
  %79 = vmatprep.subr.mxu0 0.0
  %80 = vmatpush1.msra.mxu0 0.0
  %81 = vmatprep.subr.mxu0 0.0
  %82 = vmatpush1.msra.mxu0 0.0
  %83 = vmatprep.subr.mxu0 0.0
  %84 = vmatpush1.msra.mxu0 0.0
  %85 = vmatprep.subr.mxu0 0.0
  %86 = vmatpush1.msra.mxu0 0.0
  %87 = vmatprep.subr.mxu0 0.0
  %88 = vmatpush1.msra.mxu0 0.0
  %89 = vmatprep.subr.mxu0 0.0
  %90 = vmatpush1.msra.mxu0 0.0
  %91 = vmatprep.subr.mxu0 0.0
  %92 = vmatpush1.msra.mxu0 0.0
  %93 = vmatprep.subr.mxu0 0.0
  %94 = vmatpush1.msra.mxu0 0.0
  %95 = vmatprep.mubr.f32.mxu0 0.0
  %96 = vmatmul.mubr.f32.gmra.mrb[0].mxu0 %v25
  %v97 = vpop.f32.mrb[0].mxu0
  %v98 = vadd.f32 %v21, %v97
  %v99 = vpop.f32.mrb[0].mxu0
  %100 = vdwg.mxu0
  %vm101 = vcmask 15360
  %102 = vst.msk [vmem:[%s3] sm:$0xff] %vm101, %v98
  // Predicated region
  $region14: #{_linear_small.1} parent=0 // pred_check
    _
  $region15: #{_linear_small.1} parent=0 // pred_check_branch
    %104 = sbr.rel (0) target = $region17
  $region16: #{_linear_small.1} parent=0 // pred_region
    _
  $region17: #{_linear_small.1} parent=0 // pred_fallthru
    _
  // Predicated region
  $region18: #{_linear_small.1} parent=0 // pred_check
    _
  $region19: #{_linear_small.1} parent=0 // pred_check_branch
    %106 = sbr.rel (0) target = $region21
  $region20: #{_linear_small.1} parent=0 // pred_region
    _
  $region21: #{_linear_small.1} parent=0 // pred_fallthru
    _

</llo_original>
